<compile_context>
chip_gen: v6e
topology: v6e:2x2x1
jax: 0.10.0
libtpu: 0.0.40
codegen_flags: <defaults>
</compile_context>

<pallas_src>
import functools

import jax
import jax.numpy as jnp
from jax.experimental import pallas as pl
from jax.experimental.pallas import tpu as pltpu

N_Q_TARGETS = 21
N_A_TARGETS = 9
N_OUT = N_Q_TARGETS + N_A_TARGETS
NUM_SAMPLES = 5  # MultiSampleClassifier num_samples


def _gelu(v):
    # GELU module from the reference: x * sigmoid(1.702 * x)
    return v * jax.nn.sigmoid(1.702 * v)


def head_kernel(xq_ref, xa_ref,
                w1q_ref, w1a_ref,
                bq_ref, ba_ref, bx_ref,
                w2x_ref, w2q_ref, w2a_ref, b2_ref,
                out_ref):
    # TODO(synk): dropout is identity in eval mode; training-mode dropout is not implemented.
    n_h = bq_ref.shape[-1]

    # bf16 MXU operands, f32 accumulation.
    xq = xq_ref[...].astype(jnp.bfloat16)          # (TB, n_bert)
    xa = xa_ref[...].astype(jnp.bfloat16)          # (TB, n_bert)

    # Fused first stage:  xq @ [Wq | Wx_q],  xa @ [Wa | Wx_a]  -> (TB, 2*n_h)
    yq = jnp.dot(xq, w1q_ref[...], preferred_element_type=jnp.float32)
    ya = jnp.dot(xa, w1a_ref[...], preferred_element_type=jnp.float32)

    # Slices at the n_h boundary are lane-aligned when n_h % 128 == 0.
    x_q = _gelu(yq[:, :n_h] + bq_ref[...])                 # lin_q(x_q_bert)
    x_a = _gelu(ya[:, :n_h] + ba_ref[...])                 # lin_a(x_a_bert)
    x = _gelu(yq[:, n_h:] + ya[:, n_h:] + bx_ref[...])     # lin(cat([xq, xa]))

    # Pre-averaged, lane-fused heads: one (TB, 30) block = [head_q | head_a].
    # Second stage is ~3% of the FLOPs and is fully hidden under the input DMA,
    # so the zero-padded columns in w2q/w2a are free.
    out = (jnp.dot(x.astype(jnp.bfloat16), w2x_ref[...],
                   preferred_element_type=jnp.float32)
           + jnp.dot(x_q.astype(jnp.bfloat16), w2q_ref[...],
                     preferred_element_type=jnp.float32)
           + jnp.dot(x_a.astype(jnp.bfloat16), w2a_ref[...],
                     preferred_element_type=jnp.float32)
           + b2_ref[...])

    out_ref[...] = out.astype(out_ref.dtype)       # single full-width store


def prepare_kernel_params(params, mxu_dtype=jnp.bfloat16):
    """Fuse / pre-average torch-layout params into kernel operands."""
    n_h = params["wq"].shape[1]

    # First stage: concat along output (lane) dim so each input does one matmul.
    w1q = jnp.concatenate([params["wq"], params["wx_q"]], axis=1).astype(mxu_dtype)
    w1a = jnp.concatenate([params["wa"], params["wx_a"]], axis=1).astype(mxu_dtype)

    # Heads: mean over the 5 samples (exact by linearity), then pad/concat to a
    # single (n_h, 30) lane block per LHS so the output is one aligned store.
    hq_wx = params["hq_wx"].mean(0)
    hq_wq = params["hq_wq"].mean(0)
    hq_b = params["hq_b"].mean(0)
    ha_wx = params["ha_wx"].mean(0)
    ha_wa = params["ha_wa"].mean(0)
    ha_b = params["ha_b"].mean(0)

    w2x = jnp.concatenate([hq_wx, ha_wx], axis=1).astype(mxu_dtype)              # (n_h, 30)
    w2q = jnp.concatenate(
        [hq_wq, jnp.zeros((n_h, N_A_TARGETS), hq_wq.dtype)], axis=1).astype(mxu_dtype)
    w2a = jnp.concatenate(
        [jnp.zeros((n_h, N_Q_TARGETS), ha_wa.dtype), ha_wa], axis=1).astype(mxu_dtype)
    b2 = jnp.concatenate([hq_b, ha_b], axis=1)                                   # (1, 30) f32

    return {
        "w1q": w1q, "w1a": w1a,
        "bq": params["bq"], "ba": params["ba"], "bx": params["bx"],
        "w2x": w2x, "w2q": w2q, "w2a": w2a, "b2": b2,
    }


@functools.partial(jax.jit, static_argnames=("tb",))
def head_forward(kp, x_q_bert, x_a_bert, *, tb=1024):
    B, n_bert = x_q_bert.shape
    n_h = kp["bq"].shape[-1]

    # ---- batch-tile selection (static, shape-based Python) -------------------
    # Biggest tile that fits the VMEM budget: double-buffered activation /
    # output streams + resident (double-buffer-allocated) weights.
    weight_bytes = 2 * sum(int(v.size) * v.dtype.itemsize for v in kp.values())

    def vmem_estimate(t):
        act = 2 * 2 * t * n_bert * x_q_bert.dtype.itemsize   # 2 inputs x 2 bufs
        outb = 2 * t * N_OUT * 4
        return act + outb + weight_bytes

    budget = 40 * 1024 * 1024
    tb = min(tb, B)
    while tb > 8 and vmem_estimate(tb) > budget:
        tb = max(8, tb // 2)
    if tb < B:
        tb = max(8, (tb // 8) * 8)       # keep the (8,128) block rule when tiled

    grid = (pl.cdiv(B, tb),)

    def act_spec(cols):
        return pl.BlockSpec((tb, cols), lambda i: (i, 0))

    def resident_spec(arr):              # weights/biases stay in VMEM across steps
        return pl.BlockSpec(arr.shape, lambda i: (0, 0))

    flops = int(2 * B * n_bert * 2 * n_h * 2 + 2 * B * n_h * N_OUT * 3)
    transcendentals = int(3 * B * n_h)   # sigmoid per GELU element
    bytes_accessed = int(
        2 * B * n_bert * x_q_bert.dtype.itemsize
        + sum(int(v.size) * v.dtype.itemsize for v in kp.values())
        + B * N_OUT * 4)

    return pl.pallas_call(
        head_kernel,
        out_shape=jax.ShapeDtypeStruct((B, N_OUT), jnp.float32),
        grid=grid,
        in_specs=[
            act_spec(n_bert), act_spec(n_bert),
            resident_spec(kp["w1q"]), resident_spec(kp["w1a"]),
            resident_spec(kp["bq"]), resident_spec(kp["ba"]), resident_spec(kp["bx"]),
            resident_spec(kp["w2x"]), resident_spec(kp["w2q"]), resident_spec(kp["w2a"]),
            resident_spec(kp["b2"]),
        ],
        out_specs=pl.BlockSpec((tb, N_OUT), lambda i: (i, 0)),
        compiler_params=pltpu.CompilerParams(
            dimension_semantics=("parallel",),           # megacore split on v7x
            vmem_limit_bytes=48 * 1024 * 1024),          # < v7x 64 MiB physical
        cost_estimate=pl.CostEstimate(flops=flops,
                                      transcendentals=transcendentals,
                                      bytes_accessed=bytes_accessed),
    )(x_q_bert, x_a_bert,
      kp["w1q"], kp["w1a"],
      kp["bq"], kp["ba"], kp["bx"],
      kp["w2x"], kp["w2q"], kp["w2a"], kp["b2"])


def init_params(key, n_bert, n_h):
    """Torch-style (f32) params, weights stored [in_features, out_features]."""
    ks = jax.random.split(key, 10)
    s = 0.02

    def nrm(k, shape):
        return (s * jax.random.normal(k, shape)).astype(jnp.float32)

    # lin: Linear(2*n_bert -> n_h), split into the two input halves.
    w_full = nrm(ks[0], (2 * n_bert, n_h))
    params = {
        "wx_q": w_full[:n_bert],
        "wx_a": w_full[n_bert:],
        "bx": nrm(ks[1], (1, n_h)),
        "wq": nrm(ks[2], (n_bert, n_h)),   # lin_q
        "bq": nrm(ks[3], (1, n_h)),
        "wa": nrm(ks[4], (n_bert, n_h)),   # lin_a
        "ba": nrm(ks[5], (1, n_h)),
    }
    # head_q: 5 x Linear(2*n_h -> 21), split into [x | x_q] halves.
    hq_w = nrm(ks[6], (NUM_SAMPLES, 2 * n_h, N_Q_TARGETS))
    params["hq_wx"] = hq_w[:, :n_h, :]
    params["hq_wq"] = hq_w[:, n_h:, :]
    params["hq_b"] = nrm(ks[7], (NUM_SAMPLES, 1, N_Q_TARGETS))
    # head_a: 5 x Linear(2*n_h -> 9)
    ha_w = nrm(ks[8], (NUM_SAMPLES, 2 * n_h, N_A_TARGETS))
    params["ha_wx"] = ha_w[:, :n_h, :]
    params["ha_wa"] = ha_w[:, n_h:, :]
    params["ha_b"] = nrm(ks[9], (NUM_SAMPLES, 1, N_A_TARGETS))
    return params


def reference_forward(params, x_q_bert, x_a_bert):
    """Plain-JAX f32 mirror of the PyTorch forward (eval mode)."""
    x_q = _gelu(x_q_bert @ params["wq"] + params["bq"])
    x_a = _gelu(x_a_bert @ params["wa"] + params["ba"])
    x = _gelu(x_q_bert @ params["wx_q"] + x_a_bert @ params["wx_a"] + params["bx"])
    lq = jnp.stack([x @ params["hq_wx"][i] + x_q @ params["hq_wq"][i] + params["hq_b"][i]
                    for i in range(NUM_SAMPLES)]).mean(0)
    la = jnp.stack([x @ params["ha_wx"][i] + x_a @ params["ha_wa"][i] + params["ha_b"][i]
                    for i in range(NUM_SAMPLES)]).mean(0)
    return jnp.concatenate([lq, la], axis=1)


if __name__ == "__main__":
    # Small, shape-consistent example: batch=8, n_bert=256, n_h=128, n_feats=0.
    B, N_BERT, N_H = 8, 256, 128

    key = jax.random.PRNGKey(0)
    k_params, k_xq, k_xa = jax.random.split(key, 3)

    params = init_params(k_params, N_BERT, N_H)
    kparams = prepare_kernel_params(params)      # fuse / pre-average / bf16 cast

    x_q_bert = jax.random.normal(k_xq, (B, N_BERT), dtype=jnp.float32)
    x_a_bert = jax.random.normal(k_xa, (B, N_BERT), dtype=jnp.float32)

    out = head_forward(kparams, x_q_bert, x_a_bert)
    out = jax.block_until_ready(out)

    ref = reference_forward(params, x_q_bert, x_a_bert)
    assert out.shape == (B, N_OUT), out.shape
    # bf16 MXU operands vs f32 reference -> loosened tolerance (accuracy tradeoff).
    assert jnp.allclose(out, ref, rtol=5e-2, atol=1e-2), float(jnp.abs(out - ref).max())

    print("KERNEL_OK")
</pallas_src>

<mosaic_0001>
module attributes {stable_mosaic.version = 11 : i64} {
  func.func @head_kernel(%arg0: i32, %arg1: memref<8x256xf32, #tpu.memory_space<vmem>>, %arg2: memref<8x256xf32, #tpu.memory_space<vmem>>, %arg3: memref<256x256xbf16, #tpu.memory_space<vmem>>, %arg4: memref<256x256xbf16, #tpu.memory_space<vmem>>, %arg5: memref<1x128xf32, #tpu.memory_space<vmem>>, %arg6: memref<1x128xf32, #tpu.memory_space<vmem>>, %arg7: memref<1x128xf32, #tpu.memory_space<vmem>>, %arg8: memref<128x30xbf16, #tpu.memory_space<vmem>>, %arg9: memref<128x30xbf16, #tpu.memory_space<vmem>>, %arg10: memref<128x30xbf16, #tpu.memory_space<vmem>>, %arg11: memref<1x30xf32, #tpu.memory_space<vmem>>, %arg12: memref<8x30xf32, #tpu.memory_space<vmem>>) attributes {dimension_semantics = [#tpu.dimension_semantics<parallel>], iteration_bounds = array<i64: 1>, scalar_prefetch = 0 : i64, scratch_operands = 0 : i64, tpu.core_type = #tpu.core_type<tc>, window_params = [{transform_indices = @transform_0, window_bounds = array<i64: 8, 256>}, {transform_indices = @transform_1, window_bounds = array<i64: 8, 256>}, {pipeline_mode = #tpu.pipeline_mode<synchronous>, transform_indices = @transform_2, window_bounds = array<i64: 256, 256>}, {pipeline_mode = #tpu.pipeline_mode<synchronous>, transform_indices = @transform_3, window_bounds = array<i64: 256, 256>}, {pipeline_mode = #tpu.pipeline_mode<synchronous>, transform_indices = @transform_4, window_bounds = array<i64: 1, 128>}, {pipeline_mode = #tpu.pipeline_mode<synchronous>, transform_indices = @transform_5, window_bounds = array<i64: 1, 128>}, {pipeline_mode = #tpu.pipeline_mode<synchronous>, transform_indices = @transform_6, window_bounds = array<i64: 1, 128>}, {pipeline_mode = #tpu.pipeline_mode<synchronous>, transform_indices = @transform_7, window_bounds = array<i64: 128, 30>}, {pipeline_mode = #tpu.pipeline_mode<synchronous>, transform_indices = @transform_8, window_bounds = array<i64: 128, 30>}, {pipeline_mode = #tpu.pipeline_mode<synchronous>, transform_indices = @transform_9, window_bounds = array<i64: 128, 30>}, {pipeline_mode = #tpu.pipeline_mode<synchronous>, transform_indices = @transform_10, window_bounds = array<i64: 1, 30>}, {transform_indices = @transform_11, window_bounds = array<i64: 8, 30>}]} {
    %c0 = arith.constant 0 : index
    %c0_0 = arith.constant 0 : index
    %0 = vector.load %arg1[%c0, %c0_0] : memref<8x256xf32, #tpu.memory_space<vmem>>, vector<8x256xf32>
    %1 = arith.truncf %0 : vector<8x256xf32> to vector<8x256xbf16>
    %c0_1 = arith.constant 0 : index
    %c0_2 = arith.constant 0 : index
    %2 = vector.load %arg2[%c0_1, %c0_2] : memref<8x256xf32, #tpu.memory_space<vmem>>, vector<8x256xf32>
    %3 = arith.truncf %2 : vector<8x256xf32> to vector<8x256xbf16>
    %c0_3 = arith.constant 0 : index
    %c0_4 = arith.constant 0 : index
    %4 = vector.load %arg3[%c0_3, %c0_4] : memref<256x256xbf16, #tpu.memory_space<vmem>>, vector<256x256xbf16>
    %cst = arith.constant dense<0.000000e+00> : vector<8x256xf32>
    %5 = tpu.matmul %1, %4, %cst {dimension_numbers = #tpu.dot_dimension_numbers<[1], [0], [0], [1], [0, 0, 1, 1], [], []>} : vector<8x256xbf16>, vector<256x256xbf16>, vector<8x256xf32> -> vector<8x256xf32>
    %c0_5 = arith.constant 0 : index
    %c0_6 = arith.constant 0 : index
    %6 = vector.load %arg4[%c0_5, %c0_6] : memref<256x256xbf16, #tpu.memory_space<vmem>>, vector<256x256xbf16>
    %cst_7 = arith.constant dense<0.000000e+00> : vector<8x256xf32>
    %7 = tpu.matmul %3, %6, %cst_7 {dimension_numbers = #tpu.dot_dimension_numbers<[1], [0], [0], [1], [0, 0, 1, 1], [], []>} : vector<8x256xbf16>, vector<256x256xbf16>, vector<8x256xf32> -> vector<8x256xf32>
    %8 = vector.extract_strided_slice %5 {offsets = [0, 0], sizes = [8, 128], strides = [1, 1]} : vector<8x256xf32> to vector<8x128xf32>
    %c0_8 = arith.constant 0 : index
    %c0_9 = arith.constant 0 : index
    %9 = vector.load %arg5[%c0_8, %c0_9] : memref<1x128xf32, #tpu.memory_space<vmem>>, vector<1x128xf32>
    %10 = vector.broadcast %9 : vector<1x128xf32> to vector<8x128xf32>
    %11 = arith.addf %8, %10 : vector<8x128xf32>
    %cst_10 = arith.constant 1.702000e+00 : f32
    %12 = vector.broadcast %cst_10 : f32 to vector<8x128xf32>
    %13 = arith.mulf %12, %11 : vector<8x128xf32>
    %14 = arith.negf %13 : vector<8x128xf32>
    %15 = math.exp %14 : vector<8x128xf32>
    %cst_11 = arith.constant 1.000000e+00 : f32
    %16 = vector.broadcast %cst_11 : f32 to vector<8x128xf32>
    %17 = arith.addf %16, %15 : vector<8x128xf32>
    %18 = arith.divf %16, %17 : vector<8x128xf32>
    %19 = arith.mulf %11, %18 : vector<8x128xf32>
    %20 = vector.extract_strided_slice %7 {offsets = [0, 0], sizes = [8, 128], strides = [1, 1]} : vector<8x256xf32> to vector<8x128xf32>
    %c0_12 = arith.constant 0 : index
    %c0_13 = arith.constant 0 : index
    %21 = vector.load %arg6[%c0_12, %c0_13] : memref<1x128xf32, #tpu.memory_space<vmem>>, vector<1x128xf32>
    %22 = vector.broadcast %21 : vector<1x128xf32> to vector<8x128xf32>
    %23 = arith.addf %20, %22 : vector<8x128xf32>
    %cst_14 = arith.constant 1.702000e+00 : f32
    %24 = vector.broadcast %cst_14 : f32 to vector<8x128xf32>
    %25 = arith.mulf %24, %23 : vector<8x128xf32>
    %26 = arith.negf %25 : vector<8x128xf32>
    %27 = math.exp %26 : vector<8x128xf32>
    %cst_15 = arith.constant 1.000000e+00 : f32
    %28 = vector.broadcast %cst_15 : f32 to vector<8x128xf32>
    %29 = arith.addf %28, %27 : vector<8x128xf32>
    %30 = arith.divf %28, %29 : vector<8x128xf32>
    %31 = arith.mulf %23, %30 : vector<8x128xf32>
    %32 = vector.extract_strided_slice %5 {offsets = [0, 128], sizes = [8, 128], strides = [1, 1]} : vector<8x256xf32> to vector<8x128xf32>
    %33 = vector.extract_strided_slice %7 {offsets = [0, 128], sizes = [8, 128], strides = [1, 1]} : vector<8x256xf32> to vector<8x128xf32>
    %34 = arith.addf %32, %33 : vector<8x128xf32>
    %c0_16 = arith.constant 0 : index
    %c0_17 = arith.constant 0 : index
    %35 = vector.load %arg7[%c0_16, %c0_17] : memref<1x128xf32, #tpu.memory_space<vmem>>, vector<1x128xf32>
    %36 = vector.broadcast %35 : vector<1x128xf32> to vector<8x128xf32>
    %37 = arith.addf %34, %36 : vector<8x128xf32>
    %cst_18 = arith.constant 1.702000e+00 : f32
    %38 = vector.broadcast %cst_18 : f32 to vector<8x128xf32>
    %39 = arith.mulf %38, %37 : vector<8x128xf32>
    %40 = arith.negf %39 : vector<8x128xf32>
    %41 = math.exp %40 : vector<8x128xf32>
    %cst_19 = arith.constant 1.000000e+00 : f32
    %42 = vector.broadcast %cst_19 : f32 to vector<8x128xf32>
    %43 = arith.addf %42, %41 : vector<8x128xf32>
    %44 = arith.divf %42, %43 : vector<8x128xf32>
    %45 = arith.mulf %37, %44 : vector<8x128xf32>
    %46 = arith.truncf %45 : vector<8x128xf32> to vector<8x128xbf16>
    %c0_20 = arith.constant 0 : index
    %c0_21 = arith.constant 0 : index
    %47 = vector.load %arg8[%c0_20, %c0_21] : memref<128x30xbf16, #tpu.memory_space<vmem>>, vector<128x30xbf16>
    %cst_22 = arith.constant dense<0.000000e+00> : vector<8x30xf32>
    %48 = tpu.matmul %46, %47, %cst_22 {dimension_numbers = #tpu.dot_dimension_numbers<[1], [0], [0], [1], [0, 0, 1, 1], [], []>} : vector<8x128xbf16>, vector<128x30xbf16>, vector<8x30xf32> -> vector<8x30xf32>
    %49 = arith.truncf %19 : vector<8x128xf32> to vector<8x128xbf16>
    %c0_23 = arith.constant 0 : index
    %c0_24 = arith.constant 0 : index
    %50 = vector.load %arg9[%c0_23, %c0_24] : memref<128x30xbf16, #tpu.memory_space<vmem>>, vector<128x30xbf16>
    %cst_25 = arith.constant dense<0.000000e+00> : vector<8x30xf32>
    %51 = tpu.matmul %49, %50, %cst_25 {dimension_numbers = #tpu.dot_dimension_numbers<[1], [0], [0], [1], [0, 0, 1, 1], [], []>} : vector<8x128xbf16>, vector<128x30xbf16>, vector<8x30xf32> -> vector<8x30xf32>
    %52 = arith.addf %48, %51 : vector<8x30xf32>
    %53 = arith.truncf %31 : vector<8x128xf32> to vector<8x128xbf16>
    %c0_26 = arith.constant 0 : index
    %c0_27 = arith.constant 0 : index
    %54 = vector.load %arg10[%c0_26, %c0_27] : memref<128x30xbf16, #tpu.memory_space<vmem>>, vector<128x30xbf16>
    %cst_28 = arith.constant dense<0.000000e+00> : vector<8x30xf32>
    %55 = tpu.matmul %53, %54, %cst_28 {dimension_numbers = #tpu.dot_dimension_numbers<[1], [0], [0], [1], [0, 0, 1, 1], [], []>} : vector<8x128xbf16>, vector<128x30xbf16>, vector<8x30xf32> -> vector<8x30xf32>
    %56 = arith.addf %52, %55 : vector<8x30xf32>
    %c0_29 = arith.constant 0 : index
    %c0_30 = arith.constant 0 : index
    %57 = vector.load %arg11[%c0_29, %c0_30] : memref<1x30xf32, #tpu.memory_space<vmem>>, vector<1x30xf32>
    %58 = vector.broadcast %57 : vector<1x30xf32> to vector<8x30xf32>
    %59 = arith.addf %56, %58 : vector<8x30xf32>
    %c0_31 = arith.constant 0 : index
    %c0_32 = arith.constant 0 : index
    %60 = vector.load %arg12[%c0_31, %c0_32] : memref<8x30xf32, #tpu.memory_space<vmem>>, vector<8x30xf32>
    tpu.vector_store %arg12[%c0_31, %c0_32], %59 {strides = array<i32>} : memref<8x30xf32, #tpu.memory_space<vmem>>, vector<8x30xf32>,
    return
  }
  func.func @transform_0(%arg0: i32) -> (i32, i32) {
    %c0_i32 = arith.constant 0 : i32
    %c0_i32_0 = arith.constant 0 : i32
    return %arg0, %c0_i32 : i32, i32
  }
  func.func @transform_1(%arg0: i32) -> (i32, i32) {
    %c0_i32 = arith.constant 0 : i32
    %c0_i32_0 = arith.constant 0 : i32
    return %arg0, %c0_i32 : i32, i32
  }
  func.func @transform_2(%arg0: i32) -> (i32, i32) {
    %c0_i32 = arith.constant 0 : i32
    %c0_i32_0 = arith.constant 0 : i32
    %c0_i32_1 = arith.constant 0 : i32
    return %c0_i32, %c0_i32_0 : i32, i32
  }
  func.func @transform_3(%arg0: i32) -> (i32, i32) {
    %c0_i32 = arith.constant 0 : i32
    %c0_i32_0 = arith.constant 0 : i32
    %c0_i32_1 = arith.constant 0 : i32
    return %c0_i32, %c0_i32_0 : i32, i32
  }
  func.func @transform_4(%arg0: i32) -> (i32, i32) {
    %c0_i32 = arith.constant 0 : i32
    %c0_i32_0 = arith.constant 0 : i32
    %c0_i32_1 = arith.constant 0 : i32
    return %c0_i32, %c0_i32_0 : i32, i32
  }
  func.func @transform_5(%arg0: i32) -> (i32, i32) {
    %c0_i32 = arith.constant 0 : i32
    %c0_i32_0 = arith.constant 0 : i32
    %c0_i32_1 = arith.constant 0 : i32
    return %c0_i32, %c0_i32_0 : i32, i32
  }
  func.func @transform_6(%arg0: i32) -> (i32, i32) {
    %c0_i32 = arith.constant 0 : i32
    %c0_i32_0 = arith.constant 0 : i32
    %c0_i32_1 = arith.constant 0 : i32
    return %c0_i32, %c0_i32_0 : i32, i32
  }
  func.func @transform_7(%arg0: i32) -> (i32, i32) {
    %c0_i32 = arith.constant 0 : i32
    %c0_i32_0 = arith.constant 0 : i32
    %c0_i32_1 = arith.constant 0 : i32
    return %c0_i32, %c0_i32_0 : i32, i32
  }
  func.func @transform_8(%arg0: i32) -> (i32, i32) {
    %c0_i32 = arith.constant 0 : i32
    %c0_i32_0 = arith.constant 0 : i32
    %c0_i32_1 = arith.constant 0 : i32
    return %c0_i32, %c0_i32_0 : i32, i32
  }
  func.func @transform_9(%arg0: i32) -> (i32, i32) {
    %c0_i32 = arith.constant 0 : i32
    %c0_i32_0 = arith.constant 0 : i32
    %c0_i32_1 = arith.constant 0 : i32
    return %c0_i32, %c0_i32_0 : i32, i32
  }
  func.func @transform_10(%arg0: i32) -> (i32, i32) {
    %c0_i32 = arith.constant 0 : i32
    %c0_i32_0 = arith.constant 0 : i32
    %c0_i32_1 = arith.constant 0 : i32
    return %c0_i32, %c0_i32_0 : i32, i32
  }
  func.func @transform_11(%arg0: i32) -> (i32, i32) {
    %c0_i32 = arith.constant 0 : i32
    %c0_i32_0 = arith.constant 0 : i32
    return %arg0, %c0_i32 : i32, i32
  }
}

</mosaic_0001>

<llo_original>
// kernel: head_forward.1
$region0: #{head_forward.1}
  #allocation0 [shape = 'u32[]', space=smem, size = 0x4, offset = 0x4, fixed_abs, tag = 'smem constant byte address 0x4 - core index']
  #allocation1 [shape = 'u32[144,128]{1,0:T(1,128)}', space=vmem, size = 0x12000, scoped, tag = 'internal scratch']
  %s0 = inlined_call_operand.vmem [shape: f32[8,256], index: 0, kind: input, shape index: {}]
  %s1 = inlined_call_operand.vmem [shape: f32[8,256], index: 1, kind: input, shape index: {}]
  %s2 = inlined_call_operand.hbm [shape: bf16[256,256], index: 2, kind: input, shape index: {}]
  %s3 = inlined_call_operand.hbm [shape: bf16[256,256], index: 3, kind: input, shape index: {}]
  %s4 = inlined_call_operand.vmem [shape: f32[1,128], index: 4, kind: input, shape index: {}]
  %s5 = inlined_call_operand.vmem [shape: f32[1,128], index: 5, kind: input, shape index: {}]
  %s6 = inlined_call_operand.vmem [shape: f32[1,128], index: 6, kind: input, shape index: {}]
  %s7 = inlined_call_operand.vmem [shape: bf16[128,30], index: 7, kind: input, shape index: {}]
  %s8 = inlined_call_operand.vmem [shape: bf16[128,30], index: 8, kind: input, shape index: {}]
  %s9 = inlined_call_operand.vmem [shape: bf16[128,30], index: 9, kind: input, shape index: {}]
  %s10 = inlined_call_operand.vmem [shape: f32[1,30], index: 10, kind: input, shape index: {}]
  %s11 = inlined_call_operand.hbm [shape: f32[8,30], index: 11, kind: output, shape index: {}]
  %s12 = sld [smem:[#allocation0]]
  $region62: #{head_forward.1} parent=0
    _
  %s14 = ssub.s32 1, %s12
  %s15 = scalar_select 0, %s14, %s12
  $region1: #{head_forward.1} parent=0
    #allocation2 [shape = 'u8[131072]{0}', space=vmem, size = 0x20000, scoped, tag = 'input window, operand 2, single buffered']
    #allocation3 [shape = 's32[1]{0}', space=sflag, size = 0x4, scoped, tag = 'scoped memory for head_forward.1']
    #allocation4 [shape = 's32[1]{0}', space=sflag, size = 0x4, scoped, tag = 'scoped memory for head_forward.1']
    #allocation5 [shape = 'u8[131072]{0}', space=vmem, size = 0x20000, scoped, tag = 'input window, operand 3, single buffered']
    #allocation6 [shape = 's32[1]{0}', space=sflag, size = 0x4, scoped, tag = 'scoped memory for head_forward.1']
    #allocation7 [shape = 'u8[4096]{0}', space=vmem, size = 0x1000, scoped, tag = 'output window, operand 0, single buffered']
    %16 = vsyncpa [#allocation3], 0
    %17 = vsyncpa [#allocation6], 0
    %18 = vsyncpa [#allocation4], 0
    // Predicated region
    $region2: #{head_forward.1} parent=1 // pred_check
      _
    $region3: #{head_forward.1} parent=1 // pred_check_branch
      %20 = sbr.rel (0) target = $region5
    $region4: #{head_forward.1} parent=1 // pred_region
      _
    $region5: #{head_forward.1} parent=1 // pred_fallthru
      _
    // Predicated region
    $region6: #{head_forward.1} parent=1 // pred_check
      _
    $region7: #{head_forward.1} parent=1 // pred_check_branch
      %22 = sbr.rel (0) target = $region9
    $region8: #{head_forward.1} parent=1 // pred_region
      _
    $region9: #{head_forward.1} parent=1 // pred_fallthru
      _
    // Predicated region
    $region10: #{head_forward.1} parent=1 // pred_check
      _
    $region11: #{head_forward.1} parent=1 // pred_check_branch
      %24 = sbr.rel (0) target = $region13
    $region12: #{head_forward.1} parent=1 // pred_region
      %s26 = ssub.s32 4096, 4096
      %27 = vsyncadd [#allocation3], %s26
      %s28 = sshll.u32 [#allocation2], 4
      %s29 = int_to_ptr.vmem [resolvable:$true] %s28
      %34 = dma.hbm_to_vmem [thread:$0]  %s2, 4096, %s29, [#allocation3], 128, 128, 8
    $region13: #{head_forward.1} parent=1 // pred_fallthru
      _
    // Predicated region
    $region14: #{head_forward.1} parent=1 // pred_check
      _
    $region15: #{head_forward.1} parent=1 // pred_check_branch
      %36 = sbr.rel (0) target = $region17
    $region16: #{head_forward.1} parent=1 // pred_region
      %s38 = ssub.s32 4096, 4096
      %39 = vsyncadd [#allocation6], %s38
      %s40 = sshll.u32 [#allocation5], 4
      %s41 = int_to_ptr.vmem [resolvable:$true] %s40
      %46 = dma.hbm_to_vmem [thread:$0]  %s3, 4096, %s41, [#allocation6], 128, 128, 8
    $region17: #{head_forward.1} parent=1 // pred_fallthru
      _
    // Predicated region
    $region18: #{head_forward.1} parent=1 // pred_check
      _
    $region19: #{head_forward.1} parent=1 // pred_check_branch
      %48 = sbr.rel (0) target = $region21
    $region20: #{head_forward.1} parent=1 // pred_region
      _
    $region21: #{head_forward.1} parent=1 // pred_fallthru
      _
    // Predicated region
    $region22: #{head_forward.1} parent=1 // pred_check
      _
    $region23: #{head_forward.1} parent=1 // pred_check_branch
      %50 = sbr.rel (0) target = $region25
    $region24: #{head_forward.1} parent=1 // pred_region
      _
    $region25: #{head_forward.1} parent=1 // pred_fallthru
      _
    // Predicated region
    $region26: #{head_forward.1} parent=1 // pred_check
      _
    $region27: #{head_forward.1} parent=1 // pred_check_branch
      %52 = sbr.rel (0) target = $region29
    $region28: #{head_forward.1} parent=1 // pred_region
      _
    $region29: #{head_forward.1} parent=1 // pred_fallthru
      _
    // Predicated region
    $region30: #{head_forward.1} parent=1 // pred_check
      _
    $region31: #{head_forward.1} parent=1 // pred_check_branch
      %54 = sbr.rel (0) target = $region33
    $region32: #{head_forward.1} parent=1 // pred_region
      _
    $region33: #{head_forward.1} parent=1 // pred_fallthru
      _
    // Predicated region
    $region34: #{head_forward.1} parent=1 // pred_check
      _
    $region35: #{head_forward.1} parent=1 // pred_check_branch
      %56 = sbr.rel (0) target = $region37
    $region36: #{head_forward.1} parent=1 // pred_region
      _
    $region37: #{head_forward.1} parent=1 // pred_fallthru
      _
    // Predicated region
    $region38: #{head_forward.1} parent=1 // pred_check
      _
    $region39: #{head_forward.1} parent=1 // pred_check_branch
      %58 = sbr.rel (0) target = $region41
    $region40: #{head_forward.1} parent=1 // pred_region
      _
    $region41: #{head_forward.1} parent=1 // pred_fallthru
      _
    // Predicated region
    $region42: #{head_forward.1} parent=1 // pred_check
      _
    $region43: #{head_forward.1} parent=1 // pred_check_branch
      %60 = sbr.rel (0) target = $region45
    $region44: #{head_forward.1} parent=1 // pred_region
      _
    $region45: #{head_forward.1} parent=1 // pred_fallthru
      _
    // Predicated region
    $region46: #{head_forward.1} parent=1 // pred_check
      _
    $region47: #{head_forward.1} parent=1 // pred_check_branch
      %62 = sbr.rel (0) target = $region49
    $region48: #{head_forward.1} parent=1 // pred_region
      %63 = dma.done [#allocation3], 4096
    $region49: #{head_forward.1} parent=1 // pred_fallthru
      _
    // Predicated region
    $region50: #{head_forward.1} parent=1 // pred_check
      _
    $region51: #{head_forward.1} parent=1 // pred_check_branch
      %65 = sbr.rel (0) target = $region53
    $region52: #{head_forward.1} parent=1 // pred_region
      %66 = dma.done [#allocation6], 4096
    $region53: #{head_forward.1} parent=1 // pred_fallthru
      _
    %v68 = vld [vmem:[%s0] sm:$0xff]
    %v69 = vld [vmem:[%s0 + $0x8] sm:$0xff]
    %v70 = vpack.c.bf16 %v68, %v68
    %v71 = vpack.c.bf16 %v69, %v69
    %v72 = vld [vmem:[%s1] sm:$0xff]
    %v73 = vld [vmem:[%s1 + $0x8] sm:$0xff]
    %v74 = vpack.c.bf16 %v72, %v72
    %v75 = vpack.c.bf16 %v73, %v73
    %v76 = vld [vmem:[#allocation2] sm:$0xff]
    %v77 = vld [vmem:[#allocation2 + $0x8] sm:$0xff]
    %v78 = vld [vmem:[#allocation2 + $0x10] sm:$0xff]
    %v79 = vld [vmem:[#allocation2 + $0x18] sm:$0xff]
    %v80 = vld [vmem:[#allocation2 + $0x20] sm:$0xff]
    %v81 = vld [vmem:[#allocation2 + $0x28] sm:$0xff]
    %v82 = vld [vmem:[#allocation2 + $0x30] sm:$0xff]
    %v83 = vld [vmem:[#allocation2 + $0x38] sm:$0xff]
    %v84 = vld [vmem:[#allocation2 + $0x40] sm:$0xff]
    %v85 = vld [vmem:[#allocation2 + $0x48] sm:$0xff]
    %v86 = vld [vmem:[#allocation2 + $0x50] sm:$0xff]
    %v87 = vld [vmem:[#allocation2 + $0x58] sm:$0xff]
    %v88 = vld [vmem:[#allocation2 + $0x60] sm:$0xff]
    %v89 = vld [vmem:[#allocation2 + $0x68] sm:$0xff]
    %v90 = vld [vmem:[#allocation2 + $0x70] sm:$0xff]
    %v91 = vld [vmem:[#allocation2 + $0x78] sm:$0xff]
    %v92 = vld [vmem:[#allocation2 + $0x80] sm:$0xff]
    %v93 = vld [vmem:[#allocation2 + $0x88] sm:$0xff]
    %v94 = vld [vmem:[#allocation2 + $0x90] sm:$0xff]
    %v95 = vld [vmem:[#allocation2 + $0x98] sm:$0xff]
    %v96 = vld [vmem:[#allocation2 + $0xa0] sm:$0xff]
    %v97 = vld [vmem:[#allocation2 + $0xa8] sm:$0xff]
    %v98 = vld [vmem:[#allocation2 + $0xb0] sm:$0xff]
    %v99 = vld [vmem:[#allocation2 + $0xb8] sm:$0xff]
    %v100 = vld [vmem:[#allocation2 + $0xc0] sm:$0xff]
    %v101 = vld [vmem:[#allocation2 + $0xc8] sm:$0xff]
    %v102 = vld [vmem:[#allocation2 + $0xd0] sm:$0xff]
    %v103 = vld [vmem:[#allocation2 + $0xd8] sm:$0xff]
    %v104 = vld [vmem:[#allocation2 + $0xe0] sm:$0xff]
    %v105 = vld [vmem:[#allocation2 + $0xe8] sm:$0xff]
    %v106 = vld [vmem:[#allocation2 + $0xf0] sm:$0xff]
    %v107 = vld [vmem:[#allocation2 + $0xf8] sm:$0xff]
    %v140 = vunpack.c.l.b16 %v76
    %v141 = vunpack.c.h.b16 %v76
    %v142 = vunpack.c.l.b16 %v77
    %v143 = vunpack.c.h.b16 %v77
    %v144 = vunpack.c.l.b16 %v78
    %v145 = vunpack.c.h.b16 %v78
    %v146 = vunpack.c.l.b16 %v79
    %v147 = vunpack.c.h.b16 %v79
    %v148 = vunpack.c.l.b16 %v80
    %v149 = vunpack.c.h.b16 %v80
    %v150 = vunpack.c.l.b16 %v81
    %v151 = vunpack.c.h.b16 %v81
    %v152 = vunpack.c.l.b16 %v82
    %v153 = vunpack.c.h.b16 %v82
    %v154 = vunpack.c.l.b16 %v83
    %v155 = vunpack.c.h.b16 %v83
    %v156 = vunpack.c.l.b16 %v84
    %v157 = vunpack.c.h.b16 %v84
    %v158 = vunpack.c.l.b16 %v85
    %v159 = vunpack.c.h.b16 %v85
    %v160 = vunpack.c.l.b16 %v86
    %v161 = vunpack.c.h.b16 %v86
    %v162 = vunpack.c.l.b16 %v87
    %v163 = vunpack.c.h.b16 %v87
    %v164 = vunpack.c.l.b16 %v88
    %v165 = vunpack.c.h.b16 %v88
    %v166 = vunpack.c.l.b16 %v89
    %v167 = vunpack.c.h.b16 %v89
    %v168 = vunpack.c.l.b16 %v90
    %v169 = vunpack.c.h.b16 %v90
    %v170 = vunpack.c.l.b16 %v91
    %v171 = vunpack.c.h.b16 %v91
    %v172 = vunpack.c.l.b16 %v92
    %v173 = vunpack.c.h.b16 %v92
    %v174 = vunpack.c.l.b16 %v93
    %v175 = vunpack.c.h.b16 %v93
    %v176 = vunpack.c.l.b16 %v94
    %v177 = vunpack.c.h.b16 %v94
    %v178 = vunpack.c.l.b16 %v95
    %v179 = vunpack.c.h.b16 %v95
    %v180 = vunpack.c.l.b16 %v96
    %v181 = vunpack.c.h.b16 %v96
    %v182 = vunpack.c.l.b16 %v97
    %v183 = vunpack.c.h.b16 %v97
    %v184 = vunpack.c.l.b16 %v98
    %v185 = vunpack.c.h.b16 %v98
    %v186 = vunpack.c.l.b16 %v99
    %v187 = vunpack.c.h.b16 %v99
    %v188 = vunpack.c.l.b16 %v100
    %v189 = vunpack.c.h.b16 %v100
    %v190 = vunpack.c.l.b16 %v101
    %v191 = vunpack.c.h.b16 %v101
    %v192 = vunpack.c.l.b16 %v102
    %v193 = vunpack.c.h.b16 %v102
    %v194 = vunpack.c.l.b16 %v103
    %v195 = vunpack.c.h.b16 %v103
    %v196 = vunpack.c.l.b16 %v104
    %v197 = vunpack.c.h.b16 %v104
    %v198 = vunpack.c.l.b16 %v105
    %v199 = vunpack.c.h.b16 %v105
    %v200 = vunpack.c.l.b16 %v106
    %v201 = vunpack.c.h.b16 %v106
    %v202 = vunpack.c.l.b16 %v107
    %v203 = vunpack.c.h.b16 %v107
    %v204 = vpack.c.b16 %v142, %v140
    %v205 = vpack.c.b16 %v143, %v141
    %v206 = vpack.c.b16 %v146, %v144
    %v207 = vpack.c.b16 %v147, %v145
    %v208 = vpack.c.b16 %v150, %v148
    %v209 = vpack.c.b16 %v151, %v149
    %v210 = vpack.c.b16 %v154, %v152
    %v211 = vpack.c.b16 %v155, %v153
    %v212 = vpack.c.b16 %v158, %v156
    %v213 = vpack.c.b16 %v159, %v157
    %v214 = vpack.c.b16 %v162, %v160
    %v215 = vpack.c.b16 %v163, %v161
    %v216 = vpack.c.b16 %v166, %v164
    %v217 = vpack.c.b16 %v167, %v165
    %v218 = vpack.c.b16 %v170, %v168
    %v219 = vpack.c.b16 %v171, %v169
    %v220 = vpack.c.b16 %v174, %v172
    %v221 = vpack.c.b16 %v175, %v173
    %v222 = vpack.c.b16 %v178, %v176
    %v223 = vpack.c.b16 %v179, %v177
    %v224 = vpack.c.b16 %v182, %v180
    %v225 = vpack.c.b16 %v183, %v181
    %v226 = vpack.c.b16 %v186, %v184
    %v227 = vpack.c.b16 %v187, %v185
    %v228 = vpack.c.b16 %v190, %v188
    %v229 = vpack.c.b16 %v191, %v189
    %v230 = vpack.c.b16 %v194, %v192
    %v231 = vpack.c.b16 %v195, %v193
    %v232 = vpack.c.b16 %v198, %v196
    %v233 = vpack.c.b16 %v199, %v197
    %v234 = vpack.c.b16 %v202, %v200
    %v235 = vpack.c.b16 %v203, %v201
    %268 = vmatprep.subr.bf16.mxu0 %v219
    %269 = vmatpush1.bf16.msra.mxu0 %v218
    %270 = vmatprep.subr.bf16.mxu0 %v217
    %271 = vmatpush1.bf16.msra.mxu0 %v216
    %272 = vmatprep.subr.bf16.mxu0 %v215
    %273 = vmatpush1.bf16.msra.mxu0 %v214
    %274 = vmatprep.subr.bf16.mxu0 %v213
    %275 = vmatpush1.bf16.msra.mxu0 %v212
    %276 = vmatprep.subr.bf16.mxu0 %v211
    %277 = vmatpush1.bf16.msra.mxu0 %v210
    %278 = vmatprep.subr.bf16.mxu0 %v209
    %279 = vmatpush1.bf16.msra.mxu0 %v208
    %280 = vmatprep.subr.bf16.mxu0 %v207
    %281 = vmatpush1.bf16.msra.mxu0 %v206
    %282 = vmatprep.subr.bf16.mxu0 %v205
    %283 = vmatpush1.bf16.msra.mxu0 %v204
    %284 = vmatprep.subr.bf16.mxu0 %v235
    %285 = vmatpush2.bf16.msra.mxu0 %v234
    %286 = vmatprep.subr.bf16.mxu0 %v233
    %287 = vmatpush2.bf16.msra.mxu0 %v232
    %288 = vmatprep.subr.bf16.mxu0 %v231
    %289 = vmatpush2.bf16.msra.mxu0 %v230
    %290 = vmatprep.subr.bf16.mxu0 %v229
    %291 = vmatpush2.bf16.msra.mxu0 %v228
    %292 = vmatprep.subr.bf16.mxu0 %v227
    %293 = vmatpush2.bf16.msra.mxu0 %v226
    %294 = vmatprep.subr.bf16.mxu0 %v225
    %295 = vmatpush2.bf16.msra.mxu0 %v224
    %296 = vmatprep.subr.bf16.mxu0 %v223
    %297 = vmatpush2.bf16.msra.mxu0 %v222
    %298 = vmatprep.subr.bf16.mxu0 %v221
    %299 = vmatpush2.bf16.msra.mxu0 %v220
    %300 = vmatprep.mubr.bf16.mxu0 %v71
    %301 = vmatmul.mubr.bf16.gmra.mxu0 %v70
    %v302 = vpop.f32.mrf.mxu0
    %v303 = vadd.f32 0.0, %v302
    %v304 = vpop.f32.mrf.mxu0
    %v305 = vadd.f32 0.0, %v304
    %v306 = vpop.f32.mrf.mxu0
    %v307 = vpop.f32.mrf.mxu0
    %308 = vdwg.mxu0
    %v309 = vld [vmem:[#allocation5] sm:$0xff]
    %v310 = vld [vmem:[#allocation5 + $0x8] sm:$0xff]
    %v311 = vld [vmem:[#allocation5 + $0x10] sm:$0xff]
    %v312 = vld [vmem:[#allocation5 + $0x18] sm:$0xff]
    %v313 = vld [vmem:[#allocation5 + $0x20] sm:$0xff]
    %v314 = vld [vmem:[#allocation5 + $0x28] sm:$0xff]
    %v315 = vld [vmem:[#allocation5 + $0x30] sm:$0xff]
    %v316 = vld [vmem:[#allocation5 + $0x38] sm:$0xff]
    %v317 = vld [vmem:[#allocation5 + $0x40] sm:$0xff]
    %v318 = vld [vmem:[#allocation5 + $0x48] sm:$0xff]
    %v319 = vld [vmem:[#allocation5 + $0x50] sm:$0xff]
    %v320 = vld [vmem:[#allocation5 + $0x58] sm:$0xff]
    %v321 = vld [vmem:[#allocation5 + $0x60] sm:$0xff]
    %v322 = vld [vmem:[#allocation5 + $0x68] sm:$0xff]
    %v323 = vld [vmem:[#allocation5 + $0x70] sm:$0xff]
    %v324 = vld [vmem:[#allocation5 + $0x78] sm:$0xff]
    %v325 = vld [vmem:[#allocation5 + $0x80] sm:$0xff]
    %v326 = vld [vmem:[#allocation5 + $0x88] sm:$0xff]
    %v327 = vld [vmem:[#allocation5 + $0x90] sm:$0xff]
    %v328 = vld [vmem:[#allocation5 + $0x98] sm:$0xff]
    %v329 = vld [vmem:[#allocation5 + $0xa0] sm:$0xff]
    %v330 = vld [vmem:[#allocation5 + $0xa8] sm:$0xff]
    %v331 = vld [vmem:[#allocation5 + $0xb0] sm:$0xff]
    %v332 = vld [vmem:[#allocation5 + $0xb8] sm:$0xff]
    %v333 = vld [vmem:[#allocation5 + $0xc0] sm:$0xff]
    %v334 = vld [vmem:[#allocation5 + $0xc8] sm:$0xff]
    %v335 = vld [vmem:[#allocation5 + $0xd0] sm:$0xff]
    %v336 = vld [vmem:[#allocation5 + $0xd8] sm:$0xff]
    %v337 = vld [vmem:[#allocation5 + $0xe0] sm:$0xff]
    %v338 = vld [vmem:[#allocation5 + $0xe8] sm:$0xff]
    %v339 = vld [vmem:[#allocation5 + $0xf0] sm:$0xff]
    %v340 = vld [vmem:[#allocation5 + $0xf8] sm:$0xff]
    %v373 = vunpack.c.l.b16 %v309
    %v374 = vunpack.c.h.b16 %v309
    %v375 = vunpack.c.l.b16 %v310
    %v376 = vunpack.c.h.b16 %v310
    %v377 = vunpack.c.l.b16 %v311
    %v378 = vunpack.c.h.b16 %v311
    %v379 = vunpack.c.l.b16 %v312
    %v380 = vunpack.c.h.b16 %v312
    %v381 = vunpack.c.l.b16 %v313
    %v382 = vunpack.c.h.b16 %v313
    %v383 = vunpack.c.l.b16 %v314
    %v384 = vunpack.c.h.b16 %v314
    %v385 = vunpack.c.l.b16 %v315
    %v386 = vunpack.c.h.b16 %v315
    %v387 = vunpack.c.l.b16 %v316
    %v388 = vunpack.c.h.b16 %v316
    %v389 = vunpack.c.l.b16 %v317
    %v390 = vunpack.c.h.b16 %v317
    %v391 = vunpack.c.l.b16 %v318
    %v392 = vunpack.c.h.b16 %v318
    %v393 = vunpack.c.l.b16 %v319
    %v394 = vunpack.c.h.b16 %v319
    %v395 = vunpack.c.l.b16 %v320
    %v396 = vunpack.c.h.b16 %v320
    %v397 = vunpack.c.l.b16 %v321
    %v398 = vunpack.c.h.b16 %v321
    %v399 = vunpack.c.l.b16 %v322
    %v400 = vunpack.c.h.b16 %v322
    %v401 = vunpack.c.l.b16 %v323
    %v402 = vunpack.c.h.b16 %v323
    %v403 = vunpack.c.l.b16 %v324
    %v404 = vunpack.c.h.b16 %v324
    %v405 = vunpack.c.l.b16 %v325
    %v406 = vunpack.c.h.b16 %v325
    %v407 = vunpack.c.l.b16 %v326
    %v408 = vunpack.c.h.b16 %v326
    %v409 = vunpack.c.l.b16 %v327
    %v410 = vunpack.c.h.b16 %v327
    %v411 = vunpack.c.l.b16 %v328
    %v412 = vunpack.c.h.b16 %v328
    %v413 = vunpack.c.l.b16 %v329
    %v414 = vunpack.c.h.b16 %v329
    %v415 = vunpack.c.l.b16 %v330
    %v416 = vunpack.c.h.b16 %v330
    %v417 = vunpack.c.l.b16 %v331
    %v418 = vunpack.c.h.b16 %v331
    %v419 = vunpack.c.l.b16 %v332
    %v420 = vunpack.c.h.b16 %v332
    %v421 = vunpack.c.l.b16 %v333
    %v422 = vunpack.c.h.b16 %v333
    %v423 = vunpack.c.l.b16 %v334
    %v424 = vunpack.c.h.b16 %v334
    %v425 = vunpack.c.l.b16 %v335
    %v426 = vunpack.c.h.b16 %v335
    %v427 = vunpack.c.l.b16 %v336
    %v428 = vunpack.c.h.b16 %v336
    %v429 = vunpack.c.l.b16 %v337
    %v430 = vunpack.c.h.b16 %v337
    %v431 = vunpack.c.l.b16 %v338
    %v432 = vunpack.c.h.b16 %v338
    %v433 = vunpack.c.l.b16 %v339
    %v434 = vunpack.c.h.b16 %v339
    %v435 = vunpack.c.l.b16 %v340
    %v436 = vunpack.c.h.b16 %v340
    %v437 = vpack.c.b16 %v375, %v373
    %v438 = vpack.c.b16 %v376, %v374
    %v439 = vpack.c.b16 %v379, %v377
    %v440 = vpack.c.b16 %v380, %v378
    %v441 = vpack.c.b16 %v383, %v381
    %v442 = vpack.c.b16 %v384, %v382
    %v443 = vpack.c.b16 %v387, %v385
    %v444 = vpack.c.b16 %v388, %v386
    %v445 = vpack.c.b16 %v391, %v389
    %v446 = vpack.c.b16 %v392, %v390
    %v447 = vpack.c.b16 %v395, %v393
    %v448 = vpack.c.b16 %v396, %v394
    %v449 = vpack.c.b16 %v399, %v397
    %v450 = vpack.c.b16 %v400, %v398
    %v451 = vpack.c.b16 %v403, %v401
    %v452 = vpack.c.b16 %v404, %v402
    %v453 = vpack.c.b16 %v407, %v405
    %v454 = vpack.c.b16 %v408, %v406
    %v455 = vpack.c.b16 %v411, %v409
    %v456 = vpack.c.b16 %v412, %v410
    %v457 = vpack.c.b16 %v415, %v413
    %v458 = vpack.c.b16 %v416, %v414
    %v459 = vpack.c.b16 %v419, %v417
    %v460 = vpack.c.b16 %v420, %v418
    %v461 = vpack.c.b16 %v423, %v421
    %v462 = vpack.c.b16 %v424, %v422
    %v463 = vpack.c.b16 %v427, %v425
    %v464 = vpack.c.b16 %v428, %v426
    %v465 = vpack.c.b16 %v431, %v429
    %v466 = vpack.c.b16 %v432, %v430
    %v467 = vpack.c.b16 %v435, %v433
    %v468 = vpack.c.b16 %v436, %v434
    %501 = vmatprep.subr.bf16.mxu0 %v452
    %502 = vmatpush1.bf16.msra.mxu0 %v451
    %503 = vmatprep.subr.bf16.mxu0 %v450
    %504 = vmatpush1.bf16.msra.mxu0 %v449
    %505 = vmatprep.subr.bf16.mxu0 %v448
    %506 = vmatpush1.bf16.msra.mxu0 %v447
    %507 = vmatprep.subr.bf16.mxu0 %v446
    %508 = vmatpush1.bf16.msra.mxu0 %v445
    %509 = vmatprep.subr.bf16.mxu0 %v444
    %510 = vmatpush1.bf16.msra.mxu0 %v443
    %511 = vmatprep.subr.bf16.mxu0 %v442
    %512 = vmatpush1.bf16.msra.mxu0 %v441
    %513 = vmatprep.subr.bf16.mxu0 %v440
    %514 = vmatpush1.bf16.msra.mxu0 %v439
    %515 = vmatprep.subr.bf16.mxu0 %v438
    %516 = vmatpush1.bf16.msra.mxu0 %v437
    %517 = vmatprep.subr.bf16.mxu0 %v468
    %518 = vmatpush2.bf16.msra.mxu0 %v467
    %519 = vmatprep.subr.bf16.mxu0 %v466
    %520 = vmatpush2.bf16.msra.mxu0 %v465
    %521 = vmatprep.subr.bf16.mxu0 %v464
    %522 = vmatpush2.bf16.msra.mxu0 %v463
    %523 = vmatprep.subr.bf16.mxu0 %v462
    %524 = vmatpush2.bf16.msra.mxu0 %v461
    %525 = vmatprep.subr.bf16.mxu0 %v460
    %526 = vmatpush2.bf16.msra.mxu0 %v459
    %527 = vmatprep.subr.bf16.mxu0 %v458
    %528 = vmatpush2.bf16.msra.mxu0 %v457
    %529 = vmatprep.subr.bf16.mxu0 %v456
    %530 = vmatpush2.bf16.msra.mxu0 %v455
    %531 = vmatprep.subr.bf16.mxu0 %v454
    %532 = vmatpush2.bf16.msra.mxu0 %v453
    %533 = vmatprep.mubr.bf16.mxu0 %v75
    %534 = vmatmul.mubr.bf16.gmra.mxu0 %v74
    %v535 = vpop.f32.mrf.mxu0
    %v536 = vadd.f32 0.0, %v535
    %v537 = vpop.f32.mrf.mxu0
    %v538 = vadd.f32 0.0, %v537
    %v539 = vpop.f32.mrf.mxu0
    %v540 = vpop.f32.mrf.mxu0
    %541 = vdwg.mxu0
    %v542 = vld [vmem:[%s4] sm:$0x1]
    %v544 = vlaneseq
    %v545 = vshrl.u32 %v544, 7
    %v546 = vsub.s32 0, %v545
    %v547 = vrot.slane %v542, %v546
    %v549 = vadd.f32 %v303, %v547
    %v550 = vmul.f32 %v549, 1.702
    %v551 = vxor.u32 %v550, 2147483648
    %v552 = vmul.f32 %v551, 1.442695
    %v553 = vpow.pop %v552
    %v554 = vadd.f32 %v553, 1.0
    %v555 = vrcp.pop %v554
    %v556 = vmul.f32 1.0, %v555
    %v557 = vmul.f32 %v549, %v556
    %v558 = vld [vmem:[%s5] sm:$0x1]
    %v560 = vlaneseq
    %v561 = vshrl.u32 %v560, 7
    %v562 = vsub.s32 0, %v561
    %v563 = vrot.slane %v558, %v562
    %v565 = vadd.f32 %v536, %v563
    %v566 = vmul.f32 %v565, 1.702
    %v567 = vxor.u32 %v566, 2147483648
    %v568 = vmul.f32 %v567, 1.442695
    %v569 = vpow.pop %v568
    %v570 = vadd.f32 %v569, 1.0
    %v571 = vrcp.pop %v570
    %v572 = vmul.f32 1.0, %v571
    %v573 = vmul.f32 %v565, %v572
    %v574 = vadd.f32 %v305, %v538
    %v575 = vld [vmem:[%s6] sm:$0x1]
    %v577 = vlaneseq
    %v578 = vshrl.u32 %v577, 7
    %v579 = vsub.s32 0, %v578
    %v580 = vrot.slane %v575, %v579
    %v582 = vadd.f32 %v574, %v580
    %v583 = vmul.f32 %v582, 1.702
    %v584 = vxor.u32 %v583, 2147483648
    %v585 = vmul.f32 %v584, 1.442695
    %v586 = vpow.pop %v585
    %v587 = vadd.f32 %v586, 1.0
    %v588 = vrcp.pop %v587
    %v589 = vmul.f32 1.0, %v588
    %v590 = vmul.f32 %v582, %v589
    %v591 = vpack.c.bf16 %v590, %v590
    %v592 = vld [vmem:[%s7] sm:$0xf]
    %v593 = vld [vmem:[%s7 + $0x4] sm:$0xf]
    %v594 = vld [vmem:[%s7 + $0x8] sm:$0xf]
    %v595 = vld [vmem:[%s7 + $0xc] sm:$0xf]
    %v596 = vld [vmem:[%s7 + $0x10] sm:$0xf]
    %v597 = vld [vmem:[%s7 + $0x14] sm:$0xf]
    %v598 = vld [vmem:[%s7 + $0x18] sm:$0xf]
    %v599 = vld [vmem:[%s7 + $0x1c] sm:$0xf]
    %v600 = vld [vmem:[%s7 + $0x20] sm:$0xf]
    %v601 = vld [vmem:[%s7 + $0x24] sm:$0xf]
    %v602 = vld [vmem:[%s7 + $0x28] sm:$0xf]
    %v603 = vld [vmem:[%s7 + $0x2c] sm:$0xf]
    %v604 = vld [vmem:[%s7 + $0x30] sm:$0xf]
    %v605 = vld [vmem:[%s7 + $0x34] sm:$0xf]
    %v606 = vld [vmem:[%s7 + $0x38] sm:$0xf]
    %v607 = vld [vmem:[%s7 + $0x3c] sm:$0xf]
    %v608 = vpack.c.bf16 %v557, %v557
    %v609 = vld [vmem:[%s8] sm:$0xf]
    %v610 = vld [vmem:[%s8 + $0x4] sm:$0xf]
    %v611 = vld [vmem:[%s8 + $0x8] sm:$0xf]
    %v612 = vld [vmem:[%s8 + $0xc] sm:$0xf]
    %v613 = vld [vmem:[%s8 + $0x10] sm:$0xf]
    %v614 = vld [vmem:[%s8 + $0x14] sm:$0xf]
    %v615 = vld [vmem:[%s8 + $0x18] sm:$0xf]
    %v616 = vld [vmem:[%s8 + $0x1c] sm:$0xf]
    %v617 = vld [vmem:[%s8 + $0x20] sm:$0xf]
    %v618 = vld [vmem:[%s8 + $0x24] sm:$0xf]
    %v619 = vld [vmem:[%s8 + $0x28] sm:$0xf]
    %v620 = vld [vmem:[%s8 + $0x2c] sm:$0xf]
    %v621 = vld [vmem:[%s8 + $0x30] sm:$0xf]
    %v622 = vld [vmem:[%s8 + $0x34] sm:$0xf]
    %v623 = vld [vmem:[%s8 + $0x38] sm:$0xf]
    %v624 = vld [vmem:[%s8 + $0x3c] sm:$0xf]
    %v641 = vunpack.c.l.b16 %v609
    %v642 = vunpack.c.l.b16 %v610
    %v643 = vunpack.c.l.b16 %v611
    %v644 = vunpack.c.l.b16 %v612
    %v645 = vunpack.c.l.b16 %v613
    %v646 = vunpack.c.l.b16 %v614
    %v647 = vunpack.c.l.b16 %v615
    %v648 = vunpack.c.l.b16 %v616
    %v649 = vunpack.c.l.b16 %v617
    %v650 = vunpack.c.l.b16 %v618
    %v651 = vunpack.c.l.b16 %v619
    %v652 = vunpack.c.l.b16 %v620
    %v653 = vunpack.c.l.b16 %v621
    %v654 = vunpack.c.l.b16 %v622
    %v655 = vunpack.c.l.b16 %v623
    %v656 = vunpack.c.l.b16 %v624
    %v657 = vpack.c.b16 %v642, %v641
    %v658 = vpack.c.b16 %v644, %v643
    %v659 = vpack.c.b16 %v646, %v645
    %v660 = vpack.c.b16 %v648, %v647
    %v661 = vpack.c.b16 %v650, %v649
    %v662 = vpack.c.b16 %v652, %v651
    %v663 = vpack.c.b16 %v654, %v653
    %v664 = vpack.c.b16 %v656, %v655
    %673 = vmatprep.subr.bf16.mxu0 0
    %674 = vmatpush1.bf16.msra.mxu0 %v664
    %675 = vmatprep.subr.bf16.mxu0 0
    %676 = vmatpush1.bf16.msra.mxu0 %v663
    %677 = vmatprep.subr.bf16.mxu0 0
    %678 = vmatpush1.bf16.msra.mxu0 %v662
    %679 = vmatprep.subr.bf16.mxu0 0
    %680 = vmatpush1.bf16.msra.mxu0 %v661
    %681 = vmatprep.subr.bf16.mxu0 0
    %682 = vmatpush1.bf16.msra.mxu0 %v660
    %683 = vmatprep.subr.bf16.mxu0 0
    %684 = vmatpush1.bf16.msra.mxu0 %v659
    %685 = vmatprep.subr.bf16.mxu0 0
    %686 = vmatpush1.bf16.msra.mxu0 %v658
    %687 = vmatprep.subr.bf16.mxu0 0
    %688 = vmatpush1.bf16.msra.mxu0 %v657
    %689 = vmatprep.subr.bf16.mxu0 0
    %690 = vmatpush2.bf16.msra.mxu0 0
    %691 = vmatprep.subr.bf16.mxu0 0
    %692 = vmatpush2.bf16.msra.mxu0 0
    %693 = vmatprep.subr.bf16.mxu0 0
    %694 = vmatpush2.bf16.msra.mxu0 0
    %695 = vmatprep.subr.bf16.mxu0 0
    %696 = vmatpush2.bf16.msra.mxu0 0
    %697 = vmatprep.subr.bf16.mxu0 0
    %698 = vmatpush2.bf16.msra.mxu0 0
    %699 = vmatprep.subr.bf16.mxu0 0
    %700 = vmatpush2.bf16.msra.mxu0 0
    %701 = vmatprep.subr.bf16.mxu0 0
    %702 = vmatpush2.bf16.msra.mxu0 0
    %703 = vmatprep.subr.bf16.mxu0 0
    %704 = vmatpush2.bf16.msra.mxu0 0
    %705 = vmatprep.mubr.bf16.mxu0 0
    %706 = vmatmul.mubr.bf16.gmra.mxu0 %v608
    %v707 = vpop.f32.mrf.mxu0
    %v708 = vadd.f32 0.0, %v707
    %v709 = vpop.f32.mrf.mxu0
    %v710 = vpop.f32.mrf.mxu0
    %v711 = vpop.f32.mrf.mxu0
    %712 = vdwg.mxu0
    %v729 = vunpack.c.l.b16 %v592
    %v730 = vunpack.c.l.b16 %v593
    %v731 = vunpack.c.l.b16 %v594
    %v732 = vunpack.c.l.b16 %v595
    %v733 = vunpack.c.l.b16 %v596
    %v734 = vunpack.c.l.b16 %v597
    %v735 = vunpack.c.l.b16 %v598
    %v736 = vunpack.c.l.b16 %v599
    %v737 = vunpack.c.l.b16 %v600
    %v738 = vunpack.c.l.b16 %v601
    %v739 = vunpack.c.l.b16 %v602
    %v740 = vunpack.c.l.b16 %v603
    %v741 = vunpack.c.l.b16 %v604
    %v742 = vunpack.c.l.b16 %v605
    %v743 = vunpack.c.l.b16 %v606
    %v744 = vunpack.c.l.b16 %v607
    %v745 = vpack.c.b16 %v730, %v729
    %v746 = vpack.c.b16 %v732, %v731
    %v747 = vpack.c.b16 %v734, %v733
    %v748 = vpack.c.b16 %v736, %v735
    %v749 = vpack.c.b16 %v738, %v737
    %v750 = vpack.c.b16 %v740, %v739
    %v751 = vpack.c.b16 %v742, %v741
    %v752 = vpack.c.b16 %v744, %v743
    %761 = vmatprep.subr.bf16.mxu0 0
    %762 = vmatpush1.bf16.msra.mxu0 %v752
    %763 = vmatprep.subr.bf16.mxu0 0
    %764 = vmatpush1.bf16.msra.mxu0 %v751
    %765 = vmatprep.subr.bf16.mxu0 0
    %766 = vmatpush1.bf16.msra.mxu0 %v750
    %767 = vmatprep.subr.bf16.mxu0 0
    %768 = vmatpush1.bf16.msra.mxu0 %v749
    %769 = vmatprep.subr.bf16.mxu0 0
    %770 = vmatpush1.bf16.msra.mxu0 %v748
    %771 = vmatprep.subr.bf16.mxu0 0
    %772 = vmatpush1.bf16.msra.mxu0 %v747
    %773 = vmatprep.subr.bf16.mxu0 0
    %774 = vmatpush1.bf16.msra.mxu0 %v746
    %775 = vmatprep.subr.bf16.mxu0 0
    %776 = vmatpush1.bf16.msra.mxu0 %v745
    %777 = vmatprep.subr.bf16.mxu0 0
    %778 = vmatpush2.bf16.msra.mxu0 0
    %779 = vmatprep.subr.bf16.mxu0 0
    %780 = vmatpush2.bf16.msra.mxu0 0
    %781 = vmatprep.subr.bf16.mxu0 0
    %782 = vmatpush2.bf16.msra.mxu0 0
    %783 = vmatprep.subr.bf16.mxu0 0
    %784 = vmatpush2.bf16.msra.mxu0 0
    %785 = vmatprep.subr.bf16.mxu0 0
    %786 = vmatpush2.bf16.msra.mxu0 0
    %787 = vmatprep.subr.bf16.mxu0 0
    %788 = vmatpush2.bf16.msra.mxu0 0
    %789 = vmatprep.subr.bf16.mxu0 0
    %790 = vmatpush2.bf16.msra.mxu0 0
    %791 = vmatprep.subr.bf16.mxu0 0
    %792 = vmatpush2.bf16.msra.mxu0 0
    %793 = vmatprep.mubr.bf16.mxu0 0
    %794 = vmatmul.mubr.bf16.gmra.mxu0 %v591
    %v795 = vpop.f32.mrf.mxu0
    %v796 = vadd.f32 %v708, %v795
    %v797 = vpop.f32.mrf.mxu0
    %v798 = vpop.f32.mrf.mxu0
    %v799 = vpop.f32.mrf.mxu0
    %800 = vdwg.mxu0
    %v801 = vpack.c.bf16 %v573, %v573
    %v802 = vld [vmem:[%s9] sm:$0xf]
    %v803 = vld [vmem:[%s9 + $0x4] sm:$0xf]
    %v804 = vld [vmem:[%s9 + $0x8] sm:$0xf]
    %v805 = vld [vmem:[%s9 + $0xc] sm:$0xf]
    %v806 = vld [vmem:[%s9 + $0x10] sm:$0xf]
    %v807 = vld [vmem:[%s9 + $0x14] sm:$0xf]
    %v808 = vld [vmem:[%s9 + $0x18] sm:$0xf]
    %v809 = vld [vmem:[%s9 + $0x1c] sm:$0xf]
    %v810 = vld [vmem:[%s9 + $0x20] sm:$0xf]
    %v811 = vld [vmem:[%s9 + $0x24] sm:$0xf]
    %v812 = vld [vmem:[%s9 + $0x28] sm:$0xf]
    %v813 = vld [vmem:[%s9 + $0x2c] sm:$0xf]
    %v814 = vld [vmem:[%s9 + $0x30] sm:$0xf]
    %v815 = vld [vmem:[%s9 + $0x34] sm:$0xf]
    %v816 = vld [vmem:[%s9 + $0x38] sm:$0xf]
    %v817 = vld [vmem:[%s9 + $0x3c] sm:$0xf]
    %v834 = vunpack.c.l.b16 %v802
    %v835 = vunpack.c.l.b16 %v803
    %v836 = vunpack.c.l.b16 %v804
    %v837 = vunpack.c.l.b16 %v805
    %v838 = vunpack.c.l.b16 %v806
    %v839 = vunpack.c.l.b16 %v807
    %v840 = vunpack.c.l.b16 %v808
    %v841 = vunpack.c.l.b16 %v809
    %v842 = vunpack.c.l.b16 %v810
    %v843 = vunpack.c.l.b16 %v811
    %v844 = vunpack.c.l.b16 %v812
    %v845 = vunpack.c.l.b16 %v813
    %v846 = vunpack.c.l.b16 %v814
    %v847 = vunpack.c.l.b16 %v815
    %v848 = vunpack.c.l.b16 %v816
    %v849 = vunpack.c.l.b16 %v817
    %v850 = vpack.c.b16 %v835, %v834
    %v851 = vpack.c.b16 %v837, %v836
    %v852 = vpack.c.b16 %v839, %v838
    %v853 = vpack.c.b16 %v841, %v840
    %v854 = vpack.c.b16 %v843, %v842
    %v855 = vpack.c.b16 %v845, %v844
    %v856 = vpack.c.b16 %v847, %v846
    %v857 = vpack.c.b16 %v849, %v848
    %866 = vmatprep.subr.bf16.mxu0 0
    %867 = vmatpush1.bf16.msra.mxu0 %v857
    %868 = vmatprep.subr.bf16.mxu0 0
    %869 = vmatpush1.bf16.msra.mxu0 %v856
    %870 = vmatprep.subr.bf16.mxu0 0
    %871 = vmatpush1.bf16.msra.mxu0 %v855
    %872 = vmatprep.subr.bf16.mxu0 0
    %873 = vmatpush1.bf16.msra.mxu0 %v854
    %874 = vmatprep.subr.bf16.mxu0 0
    %875 = vmatpush1.bf16.msra.mxu0 %v853
    %876 = vmatprep.subr.bf16.mxu0 0
    %877 = vmatpush1.bf16.msra.mxu0 %v852
    %878 = vmatprep.subr.bf16.mxu0 0
    %879 = vmatpush1.bf16.msra.mxu0 %v851
    %880 = vmatprep.subr.bf16.mxu0 0
    %881 = vmatpush1.bf16.msra.mxu0 %v850
    %882 = vmatprep.subr.bf16.mxu0 0
    %883 = vmatpush2.bf16.msra.mxu0 0
    %884 = vmatprep.subr.bf16.mxu0 0
    %885 = vmatpush2.bf16.msra.mxu0 0
    %886 = vmatprep.subr.bf16.mxu0 0
    %887 = vmatpush2.bf16.msra.mxu0 0
    %888 = vmatprep.subr.bf16.mxu0 0
    %889 = vmatpush2.bf16.msra.mxu0 0
    %890 = vmatprep.subr.bf16.mxu0 0
    %891 = vmatpush2.bf16.msra.mxu0 0
    %892 = vmatprep.subr.bf16.mxu0 0
    %893 = vmatpush2.bf16.msra.mxu0 0
    %894 = vmatprep.subr.bf16.mxu0 0
    %895 = vmatpush2.bf16.msra.mxu0 0
    %896 = vmatprep.subr.bf16.mxu0 0
    %897 = vmatpush2.bf16.msra.mxu0 0
    %898 = vmatprep.mubr.bf16.mxu0 0
    %899 = vmatmul.mubr.bf16.gmra.mxu0 %v801
    %v900 = vpop.f32.mrf.mxu0
    %v901 = vadd.f32 0.0, %v900
    %v902 = vpop.f32.mrf.mxu0
    %v903 = vpop.f32.mrf.mxu0
    %v904 = vpop.f32.mrf.mxu0
    %905 = vdwg.mxu0
    %v906 = vadd.f32 %v796, %v901
    %v907 = vld [vmem:[%s10] sm:$0x1]
    %v909 = vlaneseq
    %v910 = vshrl.u32 %v909, 7
    %v911 = vsub.s32 0, %v910
    %v912 = vrot.slane %v907, %v911
    %v914 = vadd.f32 %v906, %v912
    %vm915 = vcmask 244736
    %916 = vst.msk [vmem:[#allocation7] sm:$0xff] %vm915, %v914
    // Predicated region
    $region54: #{head_forward.1} parent=1 // pred_check
      _
    $region55: #{head_forward.1} parent=1 // pred_check_branch
      %918 = sbr.rel (0) target = $region57
    $region56: #{head_forward.1} parent=1 // pred_region
      %s920 = ssub.s32 128, 128
      %921 = vsyncadd [#allocation4], %s920
      %s923 = sshll.u32 [#allocation7], 4
      %s924 = int_to_ptr.vmem [resolvable:$true] %s923
      %926 = dma.vmem_to_hbm [thread:$0]  %s924, 128, %s11, [#allocation4]
    $region57: #{head_forward.1} parent=1 // pred_fallthru
      _
    // Predicated region
    $region58: #{head_forward.1} parent=1 // pred_check
      _
    $region59: #{head_forward.1} parent=1 // pred_check_branch
      %928 = sbr.rel (0) target = $region61
    $region60: #{head_forward.1} parent=1 // pred_region
      %929 = dma.done [#allocation4], 128
    $region61: #{head_forward.1} parent=1 // pred_fallthru
      _
    %930 = vsyncpa [#allocation3], 1
    %931 = vsyncpa [#allocation6], 1
    %932 = vsyncpa [#allocation4], 1

</llo_original>
